<compile_context>
chip_gen: v7x
topology: tpu7x:2x2x1
jax: 0.10.0
libtpu: 0.0.40
codegen_flags: <defaults>
</compile_context>

<pallas_src>
import jax
import jax.numpy as jnp
from jax.experimental import pallas as pl
from jax.experimental.pallas import tpu as pltpu


def _bilinear_matrix(din, dout, dtype=jnp.float32):
    """Dense (dout, din) 1-D bilinear interpolation matrix.

    Matches PyTorch F.upsample / F.interpolate(mode='bilinear',
    align_corners=False): src = max(scale * (dst + 0.5) - 0.5, 0).
    """
    scale = din / dout
    dst = jnp.arange(dout, dtype=jnp.float32)
    src = jnp.maximum(scale * (dst + 0.5) - 0.5, 0.0)
    i0 = jnp.clip(jnp.floor(src).astype(jnp.int32), 0, din - 1)
    i1 = jnp.minimum(i0 + 1, din - 1)
    w1 = src - i0.astype(jnp.float32)
    w0 = 1.0 - w1
    rows = jnp.arange(dout)
    mat = jnp.zeros((dout, din), dtype)
    mat = mat.at[rows, i0].add(w0.astype(dtype))
    mat = mat.at[rows, i1].add(w1.astype(dtype))
    return mat


def _flow_kernel(bias_ref, x_ref, bm_ref, awt_ref, o_ref):
    # bias_ref: (rb, 1)        VMEM  per-output-row bias
    # x_ref:    (1, Cin*H, W)  VMEM  one batch element (resident across tiles)
    # bm_ref:   (rb, Cin*H)    VMEM  conv-weight ⊗ row-interp rows, this tile
    # awt_ref:  (W, Wout)      VMEM  col-interp matrix (transposed), constant
    # o_ref:    (1, rb, Wout)
    rows = jnp.dot(bm_ref[...], x_ref[0], preferred_element_type=jnp.float32)
    out = jnp.dot(rows, awt_ref[...], preferred_element_type=jnp.float32)
    o_ref[0] = (out + bias_ref[...]).astype(o_ref.dtype)


def _pick_row_block(r):
    # Prefer >= 2 row tiles (shards across the two TensorCores on v7x and
    # bounds per-step VMEM at large resolutions). All candidates are 8-aligned
    # (sublane); fallback is the full row extent (always legal).
    for rb in (512, 256, 128, 64, 32, 16, 8):
        if r % rb == 0 and r // rb >= 2:
            return rb
    return r


def flow_module_forward(x, weight, bias, res_size):
    """FlowModule_SingleScale.forward.

    x:       (N, Cin, H, W) float32, NCHW (same as PyTorch)
    weight:  (Cout, Cin)  -- the 1x1 conv kernel with the trailing 1x1 squeezed
    bias:    (Cout,)
    res_size:(Hout, Wout) static tuple
    returns: (N, Cout, Hout, Wout)
    """
    N, Cin, H, W = x.shape
    Cout = weight.shape[0]
    Hout, Wout = res_size

    ah = _bilinear_matrix(H, Hout)                        # (Hout, H)
    awt = _bilinear_matrix(W, Wout).T                     # (W, Wout)
    # Fold the 1x1 conv into the row-interp matrix:
    #   B[(c,p), (k,h)] = weight[c,k] * ah[p,h]
    bm = jnp.einsum("ck,ph->cpkh", weight, ah).reshape(Cout * Hout, Cin * H)
    brow = jnp.repeat(bias, Hout).reshape(Cout * Hout, 1)  # per-row bias
    xf = x.reshape(N, Cin * H, W)                           # free NCHW view

    R = Cout * Hout
    rb = _pick_row_block(R)

    out = pl.pallas_call(
        _flow_kernel,
        out_shape=jax.ShapeDtypeStruct((N, R, Wout), x.dtype),
        grid=(N, R // rb),
        in_specs=[
            pl.BlockSpec((rb, 1), lambda n, j: (j, 0)),           # bias rows
            pl.BlockSpec((1, Cin * H, W), lambda n, j: (n, 0, 0)),  # x (per n)
            pl.BlockSpec((rb, Cin * H), lambda n, j: (j, 0)),     # B tile
            pl.BlockSpec((W, Wout), lambda n, j: (0, 0)),         # A_w^T
        ],
        out_specs=pl.BlockSpec((1, rb, Wout), lambda n, j: (n, j, 0)),
        compiler_params=pltpu.CompilerParams(
            dimension_semantics=("parallel", "parallel")),
    )(brow, xf, bm, awt)
    return out.reshape(N, Cout, Hout, Wout)


if __name__ == "__main__":
    # torch equivalent: FlowModule_SingleScale(input_channels=4, NoLabels=3)
    #   x = randn(2, 4, 16, 16);  forward(x, res_size=(32, 32))
    N, C_IN, C_OUT = 2, 4, 3
    H = W = 16
    RES = (32, 32)

    key = jax.random.PRNGKey(0)
    kx, kw, kb = jax.random.split(key, 3)
    x = jax.random.normal(kx, (N, C_IN, H, W), jnp.float32)
    weight = jax.random.normal(kw, (C_OUT, C_IN), jnp.float32) / jnp.sqrt(C_IN)
    bias = 0.1 * jax.random.normal(kb, (C_OUT,), jnp.float32)

    fwd = jax.jit(flow_module_forward, static_argnames=("res_size",))
    out = fwd(x, weight, bias, res_size=RES)
    jax.block_until_ready(out)

    assert out.shape == (N, C_OUT, RES[0], RES[1]), out.shape
    assert bool(jnp.all(jnp.isfinite(out)))

    # Pure-JAX reference of the same math (1x1 conv + separable bilinear).
    conv = jnp.einsum("nkhw,ck->nchw", x, weight) + bias[None, :, None, None]
    ah = _bilinear_matrix(H, RES[0])
    awt = _bilinear_matrix(W, RES[1]).T
    ref = jnp.einsum("ph,nchw->ncpw", ah, conv)
    ref = jnp.einsum("ncpw,wq->ncpq", ref, awt)
    assert jnp.allclose(out, ref, atol=5e-2, rtol=5e-2), float(
        jnp.max(jnp.abs(out - ref)))

    print("KERNEL_OK")
</pallas_src>

<mosaic_0001>
module attributes {stable_mosaic.version = 11 : i64} {
  func.func private @main(%arg0: i32) attributes {dimension_semantics = [#tpu.dimension_semantics<core_parallel>], iteration_bounds = array<i64: 2>, tpu.core_type = #tpu.core_type<sc_scalar_subcore>, window_params = []} {
    return
  }
}

module attributes {stable_mosaic.version = 11 : i64} {
  func.func private @main(%arg0: i32) attributes {dimension_semantics = [#tpu.dimension_semantics<core_parallel>], iteration_bounds = array<i64: 2>, tpu.core_type = #tpu.core_type<sc_scalar_subcore>, window_params = []} {
    return
  }
}

module attributes {stable_mosaic.version = 11 : i64} {
  func.func @_flow_kernel(%arg0: i32, %arg1: i32, %arg2: memref<32x1xf32, #tpu.memory_space<vmem>>, %arg3: memref<1x64x16xf32, #tpu.memory_space<vmem>>, %arg4: memref<32x64xf32, #tpu.memory_space<vmem>>, %arg5: memref<16x32xf32, #tpu.memory_space<vmem>>, %arg6: memref<1x32x32xf32, #tpu.memory_space<vmem>>) attributes {dimension_semantics = [#tpu.dimension_semantics<parallel>, #tpu.dimension_semantics<parallel>], iteration_bounds = array<i64: 2, 3>, scalar_prefetch = 0 : i64, scratch_operands = 0 : i64, tpu.core_type = #tpu.core_type<tc>, window_params = [{transform_indices = @transform_0, window_bounds = array<i64: 32, 1>}, {transform_indices = @transform_1, window_bounds = array<i64: 1, 64, 16>}, {transform_indices = @transform_2, window_bounds = array<i64: 32, 64>}, {pipeline_mode = #tpu.pipeline_mode<synchronous>, transform_indices = @transform_3, window_bounds = array<i64: 16, 32>}, {transform_indices = @transform_4, window_bounds = array<i64: 1, 32, 32>}]} {
    %c0 = arith.constant 0 : index
    %c0_0 = arith.constant 0 : index
    %0 = vector.load %arg4[%c0, %c0_0] : memref<32x64xf32, #tpu.memory_space<vmem>>, vector<32x64xf32>
    %c0_1 = arith.constant 0 : index
    %c0_2 = arith.constant 0 : index
    %c0_3 = arith.constant 0 : index
    %1 = vector.load %arg3[%c0_1, %c0_2, %c0_3] : memref<1x64x16xf32, #tpu.memory_space<vmem>>, vector<1x64x16xf32>
    %2 = vector.shape_cast %1 : vector<1x64x16xf32> to vector<64x16xf32>
    %cst = arith.constant dense<0.000000e+00> : vector<32x16xf32>
    %3 = tpu.matmul %0, %2, %cst {dimension_numbers = #tpu.dot_dimension_numbers<[1], [0], [0], [1], [0, 0, 1, 1], [], []>} : vector<32x64xf32>, vector<64x16xf32>, vector<32x16xf32> -> vector<32x16xf32>
    %c0_4 = arith.constant 0 : index
    %c0_5 = arith.constant 0 : index
    %4 = vector.load %arg5[%c0_4, %c0_5] : memref<16x32xf32, #tpu.memory_space<vmem>>, vector<16x32xf32>
    %cst_6 = arith.constant dense<0.000000e+00> : vector<32x32xf32>
    %5 = tpu.matmul %3, %4, %cst_6 {dimension_numbers = #tpu.dot_dimension_numbers<[1], [0], [0], [1], [0, 0, 1, 1], [], []>} : vector<32x16xf32>, vector<16x32xf32>, vector<32x32xf32> -> vector<32x32xf32>
    %c0_7 = arith.constant 0 : index
    %c0_8 = arith.constant 0 : index
    %6 = vector.load %arg2[%c0_7, %c0_8] : memref<32x1xf32, #tpu.memory_space<vmem>>, vector<32x1xf32>
    %7 = vector.broadcast %6 : vector<32x1xf32> to vector<32x32xf32>
    %8 = arith.addf %5, %7 : vector<32x32xf32>
    %c0_9 = arith.constant 0 : index
    %c0_10 = arith.constant 0 : index
    %c0_11 = arith.constant 0 : index
    %9 = vector.load %arg6[%c0_9, %c0_10, %c0_11] : memref<1x32x32xf32, #tpu.memory_space<vmem>>, vector<1x32x32xf32>
    %10 = vector.shape_cast %9 : vector<1x32x32xf32> to vector<32x32xf32>
    %11 = vector.shape_cast %8 : vector<32x32xf32> to vector<1x32x32xf32>
    tpu.vector_store %arg6[%c0_9, %c0_10, %c0_11], %11 {strides = array<i32>} : memref<1x32x32xf32, #tpu.memory_space<vmem>>, vector<1x32x32xf32>,
    return
  }
  func.func @transform_0(%arg0: i32, %arg1: i32) -> (i32, i32) {
    %c0_i32 = arith.constant 0 : i32
    %c0_i32_0 = arith.constant 0 : i32
    return %arg1, %c0_i32 : i32, i32
  }
  func.func @transform_1(%arg0: i32, %arg1: i32) -> (i32, i32, i32) {
    %c0_i32 = arith.constant 0 : i32
    %c0_i32_0 = arith.constant 0 : i32
    %c0_i32_1 = arith.constant 0 : i32
    return %arg0, %c0_i32, %c0_i32_0 : i32, i32, i32
  }
  func.func @transform_2(%arg0: i32, %arg1: i32) -> (i32, i32) {
    %c0_i32 = arith.constant 0 : i32
    %c0_i32_0 = arith.constant 0 : i32
    return %arg1, %c0_i32 : i32, i32
  }
  func.func @transform_3(%arg0: i32, %arg1: i32) -> (i32, i32) {
    %c0_i32 = arith.constant 0 : i32
    %c0_i32_0 = arith.constant 0 : i32
    %c0_i32_1 = arith.constant 0 : i32
    return %c0_i32, %c0_i32_0 : i32, i32
  }
  func.func @transform_4(%arg0: i32, %arg1: i32) -> (i32, i32, i32) {
    %c0_i32 = arith.constant 0 : i32
    %c0_i32_0 = arith.constant 0 : i32
    return %arg0, %arg1, %c0_i32 : i32, i32, i32
  }
}

</mosaic_0001>

<llo_original>
// kernel: flow_module_forward.1
$region0: #{flow_module_forward.1}
  #allocation0 [shape = 'u32[]', space=smem, size = 0x4, offset = 0x4, fixed_abs, tag = 'smem constant byte address 0x4 - core index']
  #allocation1 [shape = 'u32[144,128]{1,0:T(1,128)}', space=vmem, size = 0x12000, scoped, tag = 'internal scratch']
  %s0 = inlined_call_operand.vmem [shape: f32[96,1], index: 0, kind: input, shape index: {}]
  %s1 = inlined_call_operand.vmem [shape: f32[2,64,16], index: 1, kind: input, shape index: {}]
  %s2 = inlined_call_operand.vmem [shape: f32[96,64], index: 2, kind: input, shape index: {}]
  %s3 = inlined_call_operand.vmem [shape: f32[16,32], index: 3, kind: input, shape index: {}]
  %s4 = inlined_call_operand.hbm [shape: f32[2,96,32], index: 4, kind: output, shape index: {}]
  %s5 = sld [smem:[#allocation0]]
  $region49: #{flow_module_forward.1} parent=0
    _
  %s7 = ssub.s32 1, %s5
  %s8 = scalar_select 0, %s7, %s5
  $region1: #{flow_module_forward.1} parent=0
    #allocation2 [shape = 'u8[32768]{0}', space=vmem, size = 0x8000, scoped, tag = 'output window, operand 0']
    #allocation3 [shape = 's32[2]{0}', space=sflag, size = 0x8, scoped, tag = 'scoped memory for flow_module_forward.1']
    %9 = vsyncpa [#allocation3], 0
    %s10 = scalar_lea.sflag [#allocation3], 1
    %11 = vsyncpa %s10, 0
    loop: start=0, step=1, limit=8
    $region2: #{flow_module_forward.1} parent=1 // loop_pre_header
      _
    $region3: #{flow_module_forward.1} parent=1 // loop_header
      %s13 = sphi 0, %s17
      %p14 = scmp.ge.s32.totalorder %s13, 8
      %s20 = sphi 0, %s32
      %s21 = sphi 0, %s28
      %s22 = sphi 0, %s20
      %s23 = sphi 0, %s21
      %s24 = sphi 0, %s22
      %s25 = sphi 0, %s23
      %s35 = sphi 0, %s37
      %s38 = sphi 0, %s35
      %s39 = sphi 0, %s38
      %s55 = sphi 0, %s39
      %s61 = sphi 0, %s63
      %s64 = sphi 0, %s61
      %s65 = sphi 0, %s64
      %s81 = sphi 0, %s65
      %s87 = sphi 0, %s89
      %s90 = sphi 0, %s87
      %s91 = sphi 0, %s90
      %s107 = sphi 0, %s91
      %s111 = sphi 0, %s111
      %s113 = sphi 0, %s111
      %s114 = sphi 0, %s113
      %s128 = sphi 0, %s114
      %s136 = sphi 0, %s138
      %s139 = sphi 0, %s136
      %s140 = sphi 0, %s139
      %s156 = sphi 0, %s140
    $region4: #{flow_module_forward.1} parent=1 // loop_header_branch
      %16 = sbr.rel (%p14) target = $region8
    $region5: #{flow_module_forward.1} parent=1 // loop_body
      %s18 = ssub.s32 %s13, 1
      %s19 = ssub.s32 %s13, 2
      %s26 = sadd.s32 1, %s21
      %p27 = scmp.ge.s32.totalorder %s26, 3
      %s28 = scalar_select %p27, 0, %s26
      %s29 = sadd.s32 1, %s20
      %s30 = scalar_select %p27, %s29, %s20
      %p31 = scmp.ge.s32.totalorder %s30, 2
      %s32 = scalar_select %p31, 0, %s30
      %s33 = ssub.s32 %s21, %s28
      %p34 = scmp.eq.s32.totalorder %s33, 0
      %s36 = sadd.s32 %s35, 1
      %s37 = scalar_select %p34, %s35, %s36
      %p40 = pneg %p34
      %p41 = scmp.eq.s32.totalorder %s13, 5
      %p42 = por %p40, %p41
      %p43 = scmp.ne.s32.totalorder %s35, %s38
      %p44 = scmp.eq.s32.totalorder %s13, 0
      %p45 = por %p43, %p44
      %p46 = scmp.ne.s32.totalorder %s35, %s38
      %p47 = scmp.eq.s32.totalorder %s18, 5
      %p48 = por %p46, %p47
      %p49 = scmp.ne.s32.totalorder %s38, %s39
      %p50 = scmp.eq.s32.totalorder %s18, 0
      %p51 = por %p49, %p50
      %p52 = scmp.ne.s32.totalorder %s38, %s39
      %p53 = scmp.eq.s32.totalorder %s19, 5
      %p54 = por %p52, %p53
      %p56 = scmp.ne.s32.totalorder %s39, %s55
      %p57 = scmp.eq.s32.totalorder %s19, 0
      %p58 = por %p56, %p57
      %s59 = ssub.s32 %s20, %s32
      %p60 = scmp.eq.s32.totalorder %s59, 0
      %s62 = sadd.s32 %s61, 1
      %s63 = scalar_select %p60, %s61, %s62
      %p66 = pneg %p60
      %p67 = scmp.eq.s32.totalorder %s13, 5
      %p68 = por %p66, %p67
      %p69 = scmp.ne.s32.totalorder %s61, %s64
      %p70 = scmp.eq.s32.totalorder %s13, 0
      %p71 = por %p69, %p70
      %p72 = scmp.ne.s32.totalorder %s61, %s64
      %p73 = scmp.eq.s32.totalorder %s18, 5
      %p74 = por %p72, %p73
      %p75 = scmp.ne.s32.totalorder %s64, %s65
      %p76 = scmp.eq.s32.totalorder %s18, 0
      %p77 = por %p75, %p76
      %p78 = scmp.ne.s32.totalorder %s64, %s65
      %p79 = scmp.eq.s32.totalorder %s19, 5
      %p80 = por %p78, %p79
      %p82 = scmp.ne.s32.totalorder %s65, %s81
      %p83 = scmp.eq.s32.totalorder %s19, 0
      %p84 = por %p82, %p83
      %s85 = ssub.s32 %s21, %s28
      %p86 = scmp.eq.s32.totalorder %s85, 0
      %s88 = sadd.s32 %s87, 1
      %s89 = scalar_select %p86, %s87, %s88
      %p92 = pneg %p86
      %p93 = scmp.eq.s32.totalorder %s13, 5
      %p94 = por %p92, %p93
      %p95 = scmp.ne.s32.totalorder %s87, %s90
      %p96 = scmp.eq.s32.totalorder %s13, 0
      %p97 = por %p95, %p96
      %p98 = scmp.ne.s32.totalorder %s87, %s90
      %p99 = scmp.eq.s32.totalorder %s18, 5
      %p100 = por %p98, %p99
      %p101 = scmp.ne.s32.totalorder %s90, %s91
      %p102 = scmp.eq.s32.totalorder %s18, 0
      %p103 = por %p101, %p102
      %p104 = scmp.ne.s32.totalorder %s90, %s91
      %p105 = scmp.eq.s32.totalorder %s19, 5
      %p106 = por %p104, %p105
      %p108 = scmp.ne.s32.totalorder %s91, %s107
      %p109 = scmp.eq.s32.totalorder %s19, 0
      %p110 = por %p108, %p109
      %s112 = sadd.s32 %s111, 1
      %p115 = scmp.eq.s32.totalorder %s13, 5
      %p116 = scmp.ne.s32.totalorder %s111, %s113
      %p117 = scmp.eq.s32.totalorder %s13, 0
      %p118 = por %p116, %p117
      %p119 = scmp.ne.s32.totalorder %s111, %s113
      %p120 = scmp.eq.s32.totalorder %s18, 5
      %p121 = por %p119, %p120
      %p122 = scmp.ne.s32.totalorder %s113, %s114
      %p123 = scmp.eq.s32.totalorder %s18, 0
      %p124 = por %p122, %p123
      %p125 = scmp.ne.s32.totalorder %s113, %s114
      %p126 = scmp.eq.s32.totalorder %s19, 5
      %p127 = por %p125, %p126
      %p129 = scmp.ne.s32.totalorder %s114, %s128
      %p130 = scmp.eq.s32.totalorder %s19, 0
      %p131 = por %p129, %p130
      %s132 = ssub.s32 %s20, %s32
      %s133 = ssub.s32 %s21, %s28
      %s134 = sor.u32 %s132, %s133
      %p135 = scmp.eq.s32.totalorder %s134, 0
      %s137 = sadd.s32 %s136, 1
      %s138 = scalar_select %p135, %s136, %s137
      %p141 = pneg %p135
      %p142 = scmp.eq.s32.totalorder %s13, 5
      %p143 = por %p141, %p142
      %p144 = scmp.ne.s32.totalorder %s136, %s139
      %p145 = scmp.eq.s32.totalorder %s13, 0
      %p146 = por %p144, %p145
      %p147 = scmp.ne.s32.totalorder %s136, %s139
      %p148 = scmp.eq.s32.totalorder %s18, 5
      %p149 = por %p147, %p148
      %p150 = scmp.ne.s32.totalorder %s139, %s140
      %p151 = scmp.eq.s32.totalorder %s18, 0
      %p152 = por %p150, %p151
      %p153 = scmp.ne.s32.totalorder %s139, %s140
      %p154 = scmp.eq.s32.totalorder %s19, 5
      %p155 = por %p153, %p154
      %p157 = scmp.ne.s32.totalorder %s140, %s156
      %p158 = scmp.eq.s32.totalorder %s19, 0
      %p159 = por %p157, %p158
      %p160 = scmp.le.s32.totalorder 1, %s13
      %p161 = scmp.lt.s32.totalorder %s13, 7
      %p162 = pnand %p160, %p161
      %p163 = pneg %p162
      // Predicated region
      $region9: #{flow_module_forward.1} parent=5 // pred_check
        _
      $region10: #{flow_module_forward.1} parent=5 // pred_check_branch
        %165 = sbr.rel (%p162) target = $region12
      $region11: #{flow_module_forward.1} parent=5 // pred_region
        %s166 = ssub.s32 %s13, 1
        // Predicated region
        $region13: #{flow_module_forward.1} parent=11 // pred_check
          %p167 = pneg %p124
        $region14: #{flow_module_forward.1} parent=11 // pred_check_branch
          %169 = sbr.rel (%p167) target = $region16
        $region15: #{flow_module_forward.1} parent=11 // pred_region
          _
        $region16: #{flow_module_forward.1} parent=11 // pred_fallthru
          _
      $region12: #{flow_module_forward.1} parent=5 // pred_fallthru
        _
      %p170 = scmp.lt.s32.totalorder %s13, 6
      // Predicated region
      $region17: #{flow_module_forward.1} parent=5 // pred_check
        %p171 = pneg %p170
      $region18: #{flow_module_forward.1} parent=5 // pred_check_branch
        %173 = sbr.rel (%p171) target = $region20
      $region19: #{flow_module_forward.1} parent=5 // pred_region
        // Predicated region
        $region21: #{flow_module_forward.1} parent=19 // pred_check
          %p174 = pneg %p45
        $region22: #{flow_module_forward.1} parent=19 // pred_check_branch
          %176 = sbr.rel (%p174) target = $region24
        $region23: #{flow_module_forward.1} parent=19 // pred_region
          %s177 = smul.u32 4, %s21
          %p178 = scmp.lt.s32.totalorder %s177, 11
          %s179 = scalar_select %p178, %s177, 11
          %s180 = smul.addr %s179, 8
          %s181 = scalar_lea.vmem %s0, %s180
          %s182 = smul.u32 4, %s21
        $region24: #{flow_module_forward.1} parent=19 // pred_fallthru
          _
        // Predicated region
        $region25: #{flow_module_forward.1} parent=19 // pred_check
          %p183 = pneg %p71
        $region26: #{flow_module_forward.1} parent=19 // pred_check_branch
          %185 = sbr.rel (%p183) target = $region28
        $region27: #{flow_module_forward.1} parent=19 // pred_region
          %p186 = scmp.lt.s32.totalorder %s20, 1
          %s187 = scalar_select %p186, %s20, 1
          %s188 = smul.addr %s187, 8
          %s189 = smul.addr %s188, 8
          %s190 = scalar_lea.vmem %s1, %s189
        $region28: #{flow_module_forward.1} parent=19 // pred_fallthru
          _
        // Predicated region
        $region29: #{flow_module_forward.1} parent=19 // pred_check
          %p191 = pneg %p97
        $region30: #{flow_module_forward.1} parent=19 // pred_check_branch
          %193 = sbr.rel (%p191) target = $region32
        $region31: #{flow_module_forward.1} parent=19 // pred_region
          %s194 = smul.u32 4, %s21
          %p195 = scmp.lt.s32.totalorder %s194, 11
          %s196 = scalar_select %p195, %s194, 11
          %s197 = smul.addr %s196, 8
          %s198 = scalar_lea.vmem %s2, %s197
          %s199 = smul.u32 4, %s21
        $region32: #{flow_module_forward.1} parent=19 // pred_fallthru
          _
      $region20: #{flow_module_forward.1} parent=5 // pred_fallthru
        _
      %p200 = scmp.le.s32.totalorder 1, %s13
      %p201 = scmp.lt.s32.totalorder %s13, 7
      %p202 = pnand %p200, %p201
      %p203 = pneg %p202
      // Predicated region
      $region33: #{flow_module_forward.1} parent=5 // pred_check
        _
      $region34: #{flow_module_forward.1} parent=5 // pred_check_branch
        %205 = sbr.rel (%p202) target = $region36
      $region35: #{flow_module_forward.1} parent=5 // pred_region
        %s206 = ssub.s32 %s13, 1
        %s207 = smul.u32 4, %s23
        %p208 = scmp.lt.s32.totalorder %s207, 11
        %s209 = scalar_select %p208, %s207, 11
        %s210 = smul.addr %s209, 8
        %s211 = scalar_lea.vmem %s0, %s210
        %p212 = pneg %p51
        %p213 = pneg %p48
        %p214 = scmp.lt.s32.totalorder %s22, 1
        %s215 = scalar_select %p214, %s22, 1
        %s216 = smul.addr %s215, 8
        %s217 = smul.addr %s216, 8
        %s218 = scalar_lea.vmem %s1, %s217
        %p219 = pneg %p77
        %p220 = pneg %p74
        %s221 = smul.u32 4, %s23
        %p222 = scmp.lt.s32.totalorder %s221, 11
        %s223 = scalar_select %p222, %s221, 11
        %s224 = smul.addr %s223, 8
        %s225 = scalar_lea.vmem %s2, %s224
        %p226 = pneg %p103
        %p227 = pneg %p100
        %p228 = pneg %p124
        %p229 = pneg %p121
        %p230 = pneg %p152
        %p231 = pneg %p149
        %s232 = sand.u32 %s139, 1
        %s233 = scalar_lea.sflag [#allocation3], %s232
        %s234 = sand.u32 %s139, 1
        %s235 = smul.addr %s234, 32
        %s236 = scalar_lea.vmem [#allocation2], %s235
        %s237 = smul.u32 4, %s23
        %p238 = scmp.lt.s32.totalorder %s237, 11
        %s239 = scalar_select %p238, %s237, 11
        %s240 = smul.addr %s239, 8
        %s241 = scalar_lea.vmem %s0, %s240
        %s242 = smul.u32 4, %s23
        %p243 = scmp.lt.s32.totalorder %s22, 1
        %s244 = scalar_select %p243, %s22, 1
        %s245 = smul.addr %s244, 8
        %s246 = smul.addr %s245, 8
        %s247 = scalar_lea.vmem %s1, %s246
        %s248 = smul.u32 4, %s23
        %p249 = scmp.lt.s32.totalorder %s248, 11
        %s250 = scalar_select %p249, %s248, 11
        %s251 = smul.addr %s250, 8
        %s252 = scalar_lea.vmem %s2, %s251
        %s253 = smul.u32 4, %s23
        %s254 = smul.u32 4, %s23
        %v255 = vld [vmem:[%s252] sm:$0xff]
        %v256 = vld [vmem:[%s252 + $0x8] sm:$0xff]
        %v257 = vld [vmem:[%s252 + $0x10] sm:$0xff]
        %v258 = vld [vmem:[%s252 + $0x18] sm:$0xff]
        %v259 = vld [vmem:[%s247] sm:$0xff]
        %v260 = vld [vmem:[%s247 + $0x8] sm:$0xff]
        %v261 = vld [vmem:[%s247 + $0x10] sm:$0xff]
        %v262 = vld [vmem:[%s247 + $0x18] sm:$0xff]
        %v263 = vld [vmem:[%s247 + $0x20] sm:$0xff]
        %v264 = vld [vmem:[%s247 + $0x28] sm:$0xff]
        %v265 = vld [vmem:[%s247 + $0x30] sm:$0xff]
        %v266 = vld [vmem:[%s247 + $0x38] sm:$0xff]
        %vm267 = vcmask 523264
        %v269 = vsel %vm267, %v255, 0
        %v272 = vsel %vm267, %v256, 0
        %v275 = vsel %vm267, %v257, 0
        %v278 = vsel %vm267, %v258, 0
        %280 = vmatprep.subr.mxu0 0.0
        %281 = vmatpush1.msra.mxu0 %v259
        %282 = vmatprep.subr.mxu0 0.0
        %283 = vmatpush1.msra.mxu0 %v260
        %284 = vmatprep.subr.mxu0 0.0
        %285 = vmatpush1.msra.mxu0 %v261
        %286 = vmatprep.subr.mxu0 0.0
        %287 = vmatpush1.msra.mxu0 %v262
        %288 = vmatprep.subr.mxu0 0.0
        %289 = vmatpush1.msra.mxu0 %v263
        %290 = vmatprep.subr.mxu0 0.0
        %291 = vmatpush1.msra.mxu0 %v264
        %292 = vmatprep.subr.mxu0 0.0
        %293 = vmatpush1.msra.mxu0 %v265
        %294 = vmatprep.subr.mxu0 0.0
        %295 = vmatpush1.msra.mxu0 %v266
        %296 = vmatprep.subr.mxu0 0.0
        %297 = vmatpush1.msra.mxu0 0.0
        %298 = vmatprep.subr.mxu0 0.0
        %299 = vmatpush1.msra.mxu0 0.0
        %300 = vmatprep.subr.mxu0 0.0
        %301 = vmatpush1.msra.mxu0 0.0
        %302 = vmatprep.subr.mxu0 0.0
        %303 = vmatpush1.msra.mxu0 0.0
        %304 = vmatprep.subr.mxu0 0.0
        %305 = vmatpush1.msra.mxu0 0.0
        %306 = vmatprep.subr.mxu0 0.0
        %307 = vmatpush1.msra.mxu0 0.0
        %308 = vmatprep.subr.mxu0 0.0
        %309 = vmatpush1.msra.mxu0 0.0
        %310 = vmatprep.subr.mxu0 0.0
        %311 = vmatpush1.msra.mxu0 0.0
        %312 = vmatprep.subr.mxu0 0.0
        %313 = vmatpush1.msra.mxu0 0.0
        %314 = vmatprep.subr.mxu0 0.0
        %315 = vmatpush1.msra.mxu0 0.0
        %316 = vmatprep.subr.mxu0 0.0
        %317 = vmatpush1.msra.mxu0 0.0
        %318 = vmatprep.subr.mxu0 0.0
        %319 = vmatpush1.msra.mxu0 0.0
        %320 = vmatprep.subr.mxu0 0.0
        %321 = vmatpush1.msra.mxu0 0.0
        %322 = vmatprep.subr.mxu0 0.0
        %323 = vmatpush1.msra.mxu0 0.0
        %324 = vmatprep.subr.mxu0 0.0
        %325 = vmatpush1.msra.mxu0 0.0
        %326 = vmatprep.subr.mxu0 0.0
        %327 = vmatpush1.msra.mxu0 0.0
        %328 = vmatprep.subr.mxu0 0.0
        %329 = vmatpush1.msra.mxu0 0.0
        %330 = vmatprep.subr.mxu0 0.0
        %331 = vmatpush1.msra.mxu0 0.0
        %332 = vmatprep.subr.mxu0 0.0
        %333 = vmatpush1.msra.mxu0 0.0
        %334 = vmatprep.subr.mxu0 0.0
        %335 = vmatpush1.msra.mxu0 0.0
        %336 = vmatprep.subr.mxu0 0.0
        %337 = vmatpush1.msra.mxu0 0.0
        %338 = vmatprep.subr.mxu0 0.0
        %339 = vmatpush1.msra.mxu0 0.0
        %340 = vmatprep.subr.mxu0 0.0
        %341 = vmatpush1.msra.mxu0 0.0
        %342 = vmatprep.subr.mxu0 0.0
        %343 = vmatpush1.msra.mxu0 0.0
        %344 = vmatprep.mubr.f32.mxu0 0.0
        %345 = vmatmul.mubr.f32.gmra.mrb[0].mxu0 %v269
        %v346 = vpop.f32.mrb[0].mxu0
        %v347 = vadd.f32 0.0, %v346
        %v348 = vpop.f32.mrb[0].mxu0
        %349 = vmatprep.mubr.f32.mxu0 0.0
        %350 = vmatmul.mubr.f32.gmra.mrb[0].mxu0 %v272
        %v351 = vpop.f32.mrb[0].mxu0
        %v352 = vadd.f32 0.0, %v351
        %v353 = vpop.f32.mrb[0].mxu0
        %354 = vmatprep.mubr.f32.mxu0 0.0
        %355 = vmatmul.mubr.f32.gmra.mrb[0].mxu0 %v275
        %v356 = vpop.f32.mrb[0].mxu0
        %v357 = vadd.f32 0.0, %v356
        %v358 = vpop.f32.mrb[0].mxu0
        %359 = vmatprep.mubr.f32.mxu0 0.0
        %360 = vmatmul.mubr.f32.gmra.mrb[0].mxu0 %v278
        %v361 = vpop.f32.mrb[0].mxu0
        %v362 = vadd.f32 0.0, %v361
        %v363 = vpop.f32.mrb[0].mxu0
        %364 = vdwg.mxu0
        %v365 = vld [vmem:[%s3] sm:$0xff]
        %v366 = vld [vmem:[%s3 + $0x8] sm:$0xff]
        %v367 = vld [vmem:[%s241] sm:$0xff]
        %v368 = vld [vmem:[%s241 + $0x8] sm:$0xff]
        %v369 = vld [vmem:[%s241 + $0x10] sm:$0xff]
        %v370 = vld [vmem:[%s241 + $0x18] sm:$0xff]
        %372 = vset.pattern.permute.xlu0 0
        %373 = vperm.xlu0 %372, %v367
        %v374 = vpop.permute.xlu0 %373
        %377 = vset.pattern.permute.xlu0 0
        %378 = vperm.xlu0 %377, %v368
        %v379 = vpop.permute.xlu0 %378
        %382 = vset.pattern.permute.xlu0 0
        %383 = vperm.xlu0 %382, %v369
        %v384 = vpop.permute.xlu0 %383
        %387 = vset.pattern.permute.xlu0 0
        %388 = vperm.xlu0 %387, %v370
        %v389 = vpop.permute.xlu0 %388
        %vm391 = vcmask 130048
        %v393 = vsel %vm391, %v347, 0
        %v396 = vsel %vm391, %v352, 0
        %v399 = vsel %vm391, %v357, 0
        %v402 = vsel %vm391, %v362, 0
        %404 = vmatprep.subr.mxu0 0.0
        %405 = vmatpush1.msra.mxu0 %v365
        %406 = vmatprep.subr.mxu0 0.0
        %407 = vmatpush1.msra.mxu0 %v366
        %408 = vmatprep.subr.mxu0 0.0
        %409 = vmatpush1.msra.mxu0 0.0
        %410 = vmatprep.subr.mxu0 0.0
        %411 = vmatpush1.msra.mxu0 0.0
        %412 = vmatprep.subr.mxu0 0.0
        %413 = vmatpush1.msra.mxu0 0.0
        %414 = vmatprep.subr.mxu0 0.0
        %415 = vmatpush1.msra.mxu0 0.0
        %416 = vmatprep.subr.mxu0 0.0
        %417 = vmatpush1.msra.mxu0 0.0
        %418 = vmatprep.subr.mxu0 0.0
        %419 = vmatpush1.msra.mxu0 0.0
        %420 = vmatprep.subr.mxu0 0.0
        %421 = vmatpush1.msra.mxu0 0.0
        %422 = vmatprep.subr.mxu0 0.0
        %423 = vmatpush1.msra.mxu0 0.0
        %424 = vmatprep.subr.mxu0 0.0
        %425 = vmatpush1.msra.mxu0 0.0
        %426 = vmatprep.subr.mxu0 0.0
        %427 = vmatpush1.msra.mxu0 0.0
        %428 = vmatprep.subr.mxu0 0.0
        %429 = vmatpush1.msra.mxu0 0.0
        %430 = vmatprep.subr.mxu0 0.0
        %431 = vmatpush1.msra.mxu0 0.0
        %432 = vmatprep.subr.mxu0 0.0
        %433 = vmatpush1.msra.mxu0 0.0
        %434 = vmatprep.subr.mxu0 0.0
        %435 = vmatpush1.msra.mxu0 0.0
        %436 = vmatprep.subr.mxu0 0.0
        %437 = vmatpush1.msra.mxu0 0.0
        %438 = vmatprep.subr.mxu0 0.0
        %439 = vmatpush1.msra.mxu0 0.0
        %440 = vmatprep.subr.mxu0 0.0
        %441 = vmatpush1.msra.mxu0 0.0
        %442 = vmatprep.subr.mxu0 0.0
        %443 = vmatpush1.msra.mxu0 0.0
        %444 = vmatprep.subr.mxu0 0.0
        %445 = vmatpush1.msra.mxu0 0.0
        %446 = vmatprep.subr.mxu0 0.0
        %447 = vmatpush1.msra.mxu0 0.0
        %448 = vmatprep.subr.mxu0 0.0
        %449 = vmatpush1.msra.mxu0 0.0
        %450 = vmatprep.subr.mxu0 0.0
        %451 = vmatpush1.msra.mxu0 0.0
        %452 = vmatprep.subr.mxu0 0.0
        %453 = vmatpush1.msra.mxu0 0.0
        %454 = vmatprep.subr.mxu0 0.0
        %455 = vmatpush1.msra.mxu0 0.0
        %456 = vmatprep.subr.mxu0 0.0
        %457 = vmatpush1.msra.mxu0 0.0
        %458 = vmatprep.subr.mxu0 0.0
        %459 = vmatpush1.msra.mxu0 0.0
        %460 = vmatprep.subr.mxu0 0.0
        %461 = vmatpush1.msra.mxu0 0.0
        %462 = vmatprep.subr.mxu0 0.0
        %463 = vmatpush1.msra.mxu0 0.0
        %464 = vmatprep.subr.mxu0 0.0
        %465 = vmatpush1.msra.mxu0 0.0
        %466 = vmatprep.subr.mxu0 0.0
        %467 = vmatpush1.msra.mxu0 0.0
        %468 = vmatprep.mubr.f32.mxu0 0.0
        %469 = vmatmul.mubr.f32.gmra.mrb[0].mxu0 %v393
        %v470 = vpop.f32.mrb[0].mxu0
        %v471 = vadd.f32 %v374, %v470
        %v472 = vpop.f32.mrb[0].mxu0
        %473 = vmatprep.mubr.f32.mxu0 0.0
        %474 = vmatmul.mubr.f32.gmra.mrb[0].mxu0 %v396
        %v475 = vpop.f32.mrb[0].mxu0
        %v476 = vadd.f32 %v379, %v475
        %v477 = vpop.f32.mrb[0].mxu0
        %478 = vmatprep.mubr.f32.mxu0 0.0
        %479 = vmatmul.mubr.f32.gmra.mrb[0].mxu0 %v399
        %v480 = vpop.f32.mrb[0].mxu0
        %v481 = vadd.f32 %v384, %v480
        %v482 = vpop.f32.mrb[0].mxu0
        %483 = vmatprep.mubr.f32.mxu0 0.0
        %484 = vmatmul.mubr.f32.gmra.mrb[0].mxu0 %v402
        %v485 = vpop.f32.mrb[0].mxu0
        %v486 = vadd.f32 %v389, %v485
        %v487 = vpop.f32.mrb[0].mxu0
        %488 = vdwg.mxu0
        %vm489 = vcmask 261120
        %490 = vst.msk [vmem:[%s236] sm:$0xff] %vm489, %v471
        %491 = vst.msk [vmem:[%s236 + $0x8] sm:$0xff] %vm489, %v476
        %492 = vst.msk [vmem:[%s236 + $0x10] sm:$0xff] %vm489, %v481
        %493 = vst.msk [vmem:[%s236 + $0x18] sm:$0xff] %vm489, %v486
        %s494 = sand.u32 %s139, 1
        %s495 = scalar_lea.sflag [#allocation3], %s494
        %s496 = sand.u32 %s139, 1
        %s497 = smul.addr %s496, 32
        %s498 = scalar_lea.vmem [#allocation2], %s497
        // Predicated region
        $region37: #{flow_module_forward.1} parent=35 // pred_check
          %p499 = pneg %p149
        $region38: #{flow_module_forward.1} parent=35 // pred_check_branch
          %501 = sbr.rel (%p499) target = $region40
        $region39: #{flow_module_forward.1} parent=35 // pred_region
          %s502 = smul.u32 4, %s23
          %s504 = ssub.s32 512, 512
          %505 = vsyncadd %s495, %s504
          %s506 = smul.addr %s22, 12
          %s507 = sadd.s32 %s502, %s506
          %s508 = smul.addr %s507, 128
          %s509 = scalar_lea.hbm %s4, %s508
          %s510 = sshll.u32 %s498, 4
          %s511 = int_to_ptr.vmem [resolvable:$true] %s510
          %516 = dma.vmem_to_hbm [thread:$0]  %s511, 512, %s509, %s495, 128, 128, 8
        $region40: #{flow_module_forward.1} parent=35 // pred_fallthru
          _
      $region36: #{flow_module_forward.1} parent=5 // pred_fallthru
        _
      %p517 = scmp.le.s32.totalorder 2, %s13
      // Predicated region
      $region41: #{flow_module_forward.1} parent=5 // pred_check
        %p518 = pneg %p517
      $region42: #{flow_module_forward.1} parent=5 // pred_check_branch
        %520 = sbr.rel (%p518) target = $region44
      $region43: #{flow_module_forward.1} parent=5 // pred_region
        %s521 = ssub.s32 %s13, 2
        // Predicated region
        $region45: #{flow_module_forward.1} parent=43 // pred_check
          %p522 = pneg %p155
        $region46: #{flow_module_forward.1} parent=43 // pred_check_branch
          %524 = sbr.rel (%p522) target = $region48
        $region47: #{flow_module_forward.1} parent=43 // pred_region
          %s525 = sand.u32 %s140, 1
          %s526 = scalar_lea.sflag [#allocation3], %s525
          %s527 = sand.u32 %s140, 1
          %s528 = smul.addr %s527, 32
          %s529 = scalar_lea.vmem [#allocation2], %s528
          %530 = dma.done %s526, 512
        $region48: #{flow_module_forward.1} parent=43 // pred_fallthru
          _
      $region44: #{flow_module_forward.1} parent=5 // pred_fallthru
        _
    $region6: #{flow_module_forward.1} parent=1 // loop_footer
      %s17 = sadd.s32 1, %s13
    $region7: #{flow_module_forward.1} parent=1 // loop_footer_branch
      %12 = sbr.rel target = $region3
    $region8: #{flow_module_forward.1} parent=1 // loop_exit
      _
    %531 = vsyncpa [#allocation3], 1
    %s532 = scalar_lea.sflag [#allocation3], 1
    %533 = vsyncpa %s532, 1

</llo_original>
